<compile_context>
chip_gen: v7x
topology: tpu7x:2x2x1
jax: 0.10.0
libtpu: 0.0.40
codegen_flags: <defaults>
</compile_context>

<pallas_src>
import math
import jax
import jax.numpy as jnp
from jax.experimental import pallas as pl
from jax.experimental.pallas import tpu as pltpu


def _round_up(x, m):
    return ((x + m - 1) // m) * m


# -----------------------------------------------------------------------------
# Fused kernel: one (row-tile i, reduction-tile k) step of  adj @ (X @ W) + b.
# -----------------------------------------------------------------------------
def _gcn_fused_kernel(x_ref, w_ref, adj_ref, b_ref, o_ref):
    # x_ref  : (tk, F_in)   reduction slice of the node features
    # w_ref  : (F_in, Fp)   full weight, VMEM-resident (constant index map)
    # adj_ref: (tm, tk)     adjacency tile (dominant HBM stream)
    # b_ref  : (1, Fp)      bias, VMEM-resident
    # o_ref  : (tm, Fp)     f32 output tile, VMEM-resident across k (accumulator)
    k = pl.program_id(1)

    # (tk, F_in) @ (F_in, Fp) -> (tk, Fp): support slab recomputed on the fly.
    support = jnp.dot(x_ref[...], w_ref[...], preferred_element_type=jnp.float32)
    # (tm, tk) @ (tk, Fp) -> (tm, Fp): this k-slice's contribution.
    contrib = jnp.dot(adj_ref[...], support, preferred_element_type=jnp.float32)

    @pl.when(k == 0)
    def _():
        # Bias added exactly once per output tile; act = identity (module default).
        o_ref[...] = contrib + b_ref[...]

    @pl.when(k != 0)
    def _():
        o_ref[...] = o_ref[...] + contrib


def graph_convolution(x, adj, weight, bias=None, *, tm=512, tk=1024):
    """Pallas GCN forward: adj @ (x @ weight) + bias (identity activation).

    x:[N,F_in], adj:[N,N], weight:[F_in,F_out], bias:[F_out] or None. f32 in/out.
    """
    n, fin = x.shape
    fout = weight.shape[1]
    assert adj.shape == (n, n)
    assert weight.shape == (fin, fout)

    # Lane-dense output: pad F_out to a multiple of 128 lanes (unmasked stores).
    fp = max(128, _round_up(fout, 128))

    # Clamp tiles to the (padded) problem size while keeping TPU tiling rules:
    # second-to-last block dims multiple of 8, last block dims multiple of 128.
    tm_eff = min(tm, _round_up(n, 8))
    tk_eff = min(tk, _round_up(n, 128))

    # v7x megacore: nudge the parallel row-tile count to be even so the two
    # TensorCores split the "parallel" axis evenly (best effort, cheap).
    n_row_tiles = -(-n // tm_eff)
    if n_row_tiles > 1 and n_row_tiles % 2 == 1:
        tm_eff = min(tm_eff, _round_up(-(-n // (n_row_tiles + 1)), 8))

    n_pad_m = _round_up(n, tm_eff)   # adj rows / output rows
    n_pad_k = _round_up(n, tk_eff)   # adj cols / x rows (reduction axis)

    # Pad only what is needed; skip copies when N already divides the tiles.
    x_p = x if n_pad_k == n else jnp.pad(x, ((0, n_pad_k - n), (0, 0)))
    if n_pad_m == n and n_pad_k == n:
        adj_p = adj
    else:
        adj_p = jnp.pad(adj, ((0, n_pad_m - n), (0, n_pad_k - n)))
    w_p = weight if fp == fout else jnp.pad(weight, ((0, 0), (0, fp - fout)))
    if bias is None:
        b_p = jnp.zeros((1, fp), jnp.float32)
    else:
        b_p = jnp.pad(bias.reshape(1, fout), ((0, 0), (0, fp - fout)))

    grid = (n_pad_m // tm_eff, n_pad_k // tk_eff)

    out_p = pl.pallas_call(
        _gcn_fused_kernel,
        out_shape=jax.ShapeDtypeStruct((n_pad_m, fp), jnp.float32),
        grid=grid,
        in_specs=[
            pl.BlockSpec((tk_eff, fin), lambda i, k: (k, 0)),     # X slab
            pl.BlockSpec((fin, fp), lambda i, k: (0, 0)),         # W (resident)
            pl.BlockSpec((tm_eff, tk_eff), lambda i, k: (i, k)),  # adj tile
            pl.BlockSpec((1, fp), lambda i, k: (0, 0)),           # bias (resident)
        ],
        out_specs=pl.BlockSpec((tm_eff, fp), lambda i, k: (i, 0)),
        compiler_params=pltpu.CompilerParams(
            dimension_semantics=("parallel", "arbitrary")),
        cost_estimate=pl.CostEstimate(
            flops=2 * n_pad_m * n_pad_k * fp
            + 2 * grid[0] * n_pad_k * fin * fp,        # recomputed support
            transcendentals=0,
            bytes_accessed=4 * (n_pad_m * n_pad_k      # adj (dominant stream)
                                + grid[0] * n_pad_k * fin   # X re-reads
                                + fin * fp + fp             # W + bias
                                + n_pad_m * fp)),           # output
    )(x_p, w_p, adj_p, b_p)

    # Strip padding back to the logical [N, F_out] result.
    return out_p[:n, :fout]


def init_params(key, in_features, out_features):
    """Deterministic re-implementation of reset_parameters():
    uniform(-stdv, stdv) with stdv = 1/sqrt(out_features)."""
    stdv = 1.0 / math.sqrt(out_features)
    kw, kb = jax.random.split(key)
    weight = jax.random.uniform(
        kw, (in_features, out_features), dtype=jnp.float32, minval=-stdv, maxval=stdv
    )
    bias = jax.random.uniform(
        kb, (out_features,), dtype=jnp.float32, minval=-stdv, maxval=stdv
    )
    return weight, bias


if __name__ == "__main__":
    key = jax.random.PRNGKey(0)
    k_x, k_adj, k_p = jax.random.split(key, 3)

    # Small synthetic graph; non-multiple N exercises the padding paths.
    N, F_IN, F_OUT = 300, 32, 8

    x = jax.random.normal(k_x, (N, F_IN), dtype=jnp.float32)

    # Symmetric normalized adjacency-like matrix (dense), as VGAE would feed.
    a = jax.random.uniform(k_adj, (N, N), dtype=jnp.float32)
    a = (a + a.T) * 0.5 + jnp.eye(N, dtype=jnp.float32)
    d_inv_sqrt = 1.0 / jnp.sqrt(jnp.sum(a, axis=1))
    adj = a * d_inv_sqrt[:, None] * d_inv_sqrt[None, :]

    weight, bias = init_params(k_p, F_IN, F_OUT)

    # Reference in plain JAX (same math as the torch.mm path, act = identity).
    ref = adj @ (x @ weight) + bias[None, :]

    # Small tiles exercise padding + the multi-step K reduction + the even
    # row-tile nudge; default tiles exercise the clamp-to-problem-size path.
    for kwargs in ({"tm": 128, "tk": 128}, {}):
        out = graph_convolution(x, adj, weight, bias, **kwargs)
        out = jax.block_until_ready(out)
        assert out.shape == (N, F_OUT)
        err = float(jnp.max(jnp.abs(out - ref)))
        assert jnp.allclose(out, ref, atol=2e-4, rtol=2e-4), err

    print("KERNEL_OK")
</pallas_src>

<mosaic_0001>
module attributes {stable_mosaic.version = 11 : i64} {
  func.func @_gcn_fused_kernel(%arg0: i32, %arg1: i32, %arg2: memref<128x32xf32, #tpu.memory_space<vmem>>, %arg3: memref<32x128xf32, #tpu.memory_space<vmem>>, %arg4: memref<80x128xf32, #tpu.memory_space<vmem>>, %arg5: memref<1x128xf32, #tpu.memory_space<vmem>>, %arg6: memref<80x128xf32, #tpu.memory_space<vmem>>) attributes {dimension_semantics = [#tpu.dimension_semantics<parallel>, #tpu.dimension_semantics<arbitrary>], iteration_bounds = array<i64: 4, 3>, scalar_prefetch = 0 : i64, scratch_operands = 0 : i64, tpu.core_type = #tpu.core_type<tc>, window_params = [{transform_indices = @transform_0, window_bounds = array<i64: 128, 32>}, {pipeline_mode = #tpu.pipeline_mode<synchronous>, transform_indices = @transform_1, window_bounds = array<i64: 32, 128>}, {transform_indices = @transform_2, window_bounds = array<i64: 80, 128>}, {pipeline_mode = #tpu.pipeline_mode<synchronous>, transform_indices = @transform_3, window_bounds = array<i64: 1, 128>}, {transform_indices = @transform_4, window_bounds = array<i64: 80, 128>}]} {
    %c0 = arith.constant 0 : index
    %c0_0 = arith.constant 0 : index
    %0 = vector.load %arg2[%c0, %c0_0] : memref<128x32xf32, #tpu.memory_space<vmem>>, vector<128x32xf32>
    %c0_1 = arith.constant 0 : index
    %c0_2 = arith.constant 0 : index
    %1 = vector.load %arg3[%c0_1, %c0_2] : memref<32x128xf32, #tpu.memory_space<vmem>>, vector<32x128xf32>
    %cst = arith.constant dense<0.000000e+00> : vector<128x128xf32>
    %2 = tpu.matmul %0, %1, %cst {dimension_numbers = #tpu.dot_dimension_numbers<[1], [0], [0], [1], [0, 0, 1, 1], [], []>} : vector<128x32xf32>, vector<32x128xf32>, vector<128x128xf32> -> vector<128x128xf32>
    %c0_3 = arith.constant 0 : index
    %c0_4 = arith.constant 0 : index
    %3 = vector.load %arg4[%c0_3, %c0_4] : memref<80x128xf32, #tpu.memory_space<vmem>>, vector<80x128xf32>
    %cst_5 = arith.constant dense<0.000000e+00> : vector<80x128xf32>
    %4 = tpu.matmul %3, %2, %cst_5 {dimension_numbers = #tpu.dot_dimension_numbers<[1], [0], [0], [1], [0, 0, 1, 1], [], []>} : vector<80x128xf32>, vector<128x128xf32>, vector<80x128xf32> -> vector<80x128xf32>
    %c0_i32 = arith.constant 0 : i32
    %5 = arith.cmpi eq, %arg1, %c0_i32 : i32
    %6 = arith.extui %5 : i1 to i32
    %c0_i32_6 = arith.constant 0 : i32
    %7 = arith.cmpi ne, %6, %c0_i32_6 : i32
    scf.if %7 {
      %c0_9 = arith.constant 0 : index
      %c0_10 = arith.constant 0 : index
      %11 = vector.load %arg5[%c0_9, %c0_10] : memref<1x128xf32, #tpu.memory_space<vmem>>, vector<1x128xf32>
      %12 = vector.broadcast %11 : vector<1x128xf32> to vector<80x128xf32>
      %13 = arith.addf %4, %12 : vector<80x128xf32>
      %c0_11 = arith.constant 0 : index
      %c0_12 = arith.constant 0 : index
      %14 = vector.load %arg6[%c0_11, %c0_12] : memref<80x128xf32, #tpu.memory_space<vmem>>, vector<80x128xf32>
      tpu.vector_store %arg6[%c0_11, %c0_12], %13 {strides = array<i32>} : memref<80x128xf32, #tpu.memory_space<vmem>>, vector<80x128xf32>,
    } else {
    }
    %c0_i32_7 = arith.constant 0 : i32
    %8 = arith.cmpi ne, %arg1, %c0_i32_7 : i32
    %9 = arith.extui %8 : i1 to i32
    %c0_i32_8 = arith.constant 0 : i32
    %10 = arith.cmpi ne, %9, %c0_i32_8 : i32
    scf.if %10 {
      %c0_9 = arith.constant 0 : index
      %c0_10 = arith.constant 0 : index
      %11 = vector.load %arg6[%c0_9, %c0_10] : memref<80x128xf32, #tpu.memory_space<vmem>>, vector<80x128xf32>
      %12 = arith.addf %11, %4 : vector<80x128xf32>
      %c0_11 = arith.constant 0 : index
      %c0_12 = arith.constant 0 : index
      %13 = vector.load %arg6[%c0_11, %c0_12] : memref<80x128xf32, #tpu.memory_space<vmem>>, vector<80x128xf32>
      tpu.vector_store %arg6[%c0_11, %c0_12], %12 {strides = array<i32>} : memref<80x128xf32, #tpu.memory_space<vmem>>, vector<80x128xf32>,
    } else {
    }
    return
  }
  func.func @transform_0(%arg0: i32, %arg1: i32) -> (i32, i32) {
    %c0_i32 = arith.constant 0 : i32
    %c0_i32_0 = arith.constant 0 : i32
    return %arg1, %c0_i32 : i32, i32
  }
  func.func @transform_1(%arg0: i32, %arg1: i32) -> (i32, i32) {
    %c0_i32 = arith.constant 0 : i32
    %c0_i32_0 = arith.constant 0 : i32
    %c0_i32_1 = arith.constant 0 : i32
    return %c0_i32, %c0_i32_0 : i32, i32
  }
  func.func @transform_2(%arg0: i32, %arg1: i32) -> (i32, i32) {
    %c0_i32 = arith.constant 0 : i32
    return %arg0, %arg1 : i32, i32
  }
  func.func @transform_3(%arg0: i32, %arg1: i32) -> (i32, i32) {
    %c0_i32 = arith.constant 0 : i32
    %c0_i32_0 = arith.constant 0 : i32
    %c0_i32_1 = arith.constant 0 : i32
    return %c0_i32, %c0_i32_0 : i32, i32
  }
  func.func @transform_4(%arg0: i32, %arg1: i32) -> (i32, i32) {
    %c0_i32 = arith.constant 0 : i32
    %c0_i32_0 = arith.constant 0 : i32
    return %arg0, %c0_i32 : i32, i32
  }
}

</mosaic_0001>

<llo_original>
// kernel: tpu_custom_call.1
$region0: #{tpu_custom_call.1}
  #allocation0 [shape = 'u32[]', space=smem, size = 0x4, offset = 0x4, fixed_abs, tag = 'smem constant byte address 0x4 - core index']
  #allocation1 [shape = 'u32[144,128]{1,0:T(1,128)}', space=vmem, size = 0x12000, scoped, tag = 'internal scratch']
  %s0 = inlined_call_operand.vmem [shape: f32[384,32], index: 0, kind: input, shape index: {}]
  %s1 = inlined_call_operand.vmem [shape: f32[32,128], index: 1, kind: input, shape index: {}]
  %s2 = inlined_call_operand.hbm [shape: f32[320,384], index: 2, kind: input, shape index: {}]
  %s3 = inlined_call_operand.vmem [shape: f32[1,128], index: 3, kind: input, shape index: {}]
  %s4 = inlined_call_operand.hbm [shape: f32[320,128], index: 4, kind: output, shape index: {}]
  %s5 = sld [smem:[#allocation0]]
  $region61: #{tpu_custom_call.1} parent=0
    _
  %s7 = ssub.s32 1, %s5
  %s8 = scalar_select 0, %s7, %s5
  $region1: #{tpu_custom_call.1} parent=0
    #allocation2 [shape = 'u8[81920]{0}', space=vmem, size = 0x14000, scoped, tag = 'input window, operand 2']
    #allocation3 [shape = 's32[2]{0}', space=sflag, size = 0x8, scoped, tag = 'scoped memory for tpu_custom_call.1']
    #allocation4 [shape = 's32[2]{0}', space=sflag, size = 0x8, scoped, tag = 'scoped memory for tpu_custom_call.1']
    #allocation5 [shape = 'u8[81920]{0}', space=vmem, size = 0x14000, scoped, tag = 'output window, operand 0']
    %9 = vsyncpa [#allocation3], 0
    %s10 = scalar_lea.sflag [#allocation3], 1
    %11 = vsyncpa %s10, 0
    %12 = vsyncpa [#allocation4], 0
    %s13 = scalar_lea.sflag [#allocation4], 1
    %14 = vsyncpa %s13, 0
    loop: start=0, step=1, limit=14
    $region2: #{tpu_custom_call.1} parent=1 // loop_pre_header
      _
    $region3: #{tpu_custom_call.1} parent=1 // loop_header
      %s16 = sphi 0, %s20
      %p17 = scmp.ge.s32.totalorder %s16, 14
      %s23 = sphi 0, %s35
      %s24 = sphi 0, %s31
      %s25 = sphi 0, %s23
      %s26 = sphi 0, %s24
      %s27 = sphi 0, %s25
      %s28 = sphi 0, %s26
      %s38 = sphi 0, %s40
      %s41 = sphi 0, %s38
      %s42 = sphi 0, %s41
      %s58 = sphi 0, %s42
      %s62 = sphi 0, %s62
      %s64 = sphi 0, %s62
      %s65 = sphi 0, %s64
      %s79 = sphi 0, %s65
      %s87 = sphi 0, %s89
      %s90 = sphi 0, %s87
      %s91 = sphi 0, %s90
      %s107 = sphi 0, %s91
      %s111 = sphi 0, %s111
      %s113 = sphi 0, %s111
      %s114 = sphi 0, %s113
      %s128 = sphi 0, %s114
      %s134 = sphi 0, %s136
      %s137 = sphi 0, %s134
      %s138 = sphi 0, %s137
      %s154 = sphi 0, %s138
    $region4: #{tpu_custom_call.1} parent=1 // loop_header_branch
      %19 = sbr.rel (%p17) target = $region8
    $region5: #{tpu_custom_call.1} parent=1 // loop_body
      %s21 = ssub.s32 %s16, 1
      %s22 = ssub.s32 %s16, 2
      %s29 = sadd.s32 1, %s24
      %p30 = scmp.ge.s32.totalorder %s29, 3
      %s31 = scalar_select %p30, 0, %s29
      %s32 = sadd.s32 1, %s23
      %s33 = scalar_select %p30, %s32, %s23
      %p34 = scmp.ge.s32.totalorder %s33, 4
      %s35 = scalar_select %p34, 0, %s33
      %s36 = ssub.s32 %s24, %s31
      %p37 = scmp.eq.s32.totalorder %s36, 0
      %s39 = sadd.s32 %s38, 1
      %s40 = scalar_select %p37, %s38, %s39
      %p43 = pneg %p37
      %p44 = scmp.eq.s32.totalorder %s16, 11
      %p45 = por %p43, %p44
      %p46 = scmp.ne.s32.totalorder %s38, %s41
      %p47 = scmp.eq.s32.totalorder %s16, 0
      %p48 = por %p46, %p47
      %p49 = scmp.ne.s32.totalorder %s38, %s41
      %p50 = scmp.eq.s32.totalorder %s21, 11
      %p51 = por %p49, %p50
      %p52 = scmp.ne.s32.totalorder %s41, %s42
      %p53 = scmp.eq.s32.totalorder %s21, 0
      %p54 = por %p52, %p53
      %p55 = scmp.ne.s32.totalorder %s41, %s42
      %p56 = scmp.eq.s32.totalorder %s22, 11
      %p57 = por %p55, %p56
      %p59 = scmp.ne.s32.totalorder %s42, %s58
      %p60 = scmp.eq.s32.totalorder %s22, 0
      %p61 = por %p59, %p60
      %s63 = sadd.s32 %s62, 1
      %p66 = scmp.eq.s32.totalorder %s16, 11
      %p67 = scmp.ne.s32.totalorder %s62, %s64
      %p68 = scmp.eq.s32.totalorder %s16, 0
      %p69 = por %p67, %p68
      %p70 = scmp.ne.s32.totalorder %s62, %s64
      %p71 = scmp.eq.s32.totalorder %s21, 11
      %p72 = por %p70, %p71
      %p73 = scmp.ne.s32.totalorder %s64, %s65
      %p74 = scmp.eq.s32.totalorder %s21, 0
      %p75 = por %p73, %p74
      %p76 = scmp.ne.s32.totalorder %s64, %s65
      %p77 = scmp.eq.s32.totalorder %s22, 11
      %p78 = por %p76, %p77
      %p80 = scmp.ne.s32.totalorder %s65, %s79
      %p81 = scmp.eq.s32.totalorder %s22, 0
      %p82 = por %p80, %p81
      %s83 = ssub.s32 %s23, %s35
      %s84 = ssub.s32 %s24, %s31
      %s85 = sor.u32 %s83, %s84
      %p86 = scmp.eq.s32.totalorder %s85, 0
      %s88 = sadd.s32 %s87, 1
      %s89 = scalar_select %p86, %s87, %s88
      %p92 = pneg %p86
      %p93 = scmp.eq.s32.totalorder %s16, 11
      %p94 = por %p92, %p93
      %p95 = scmp.ne.s32.totalorder %s87, %s90
      %p96 = scmp.eq.s32.totalorder %s16, 0
      %p97 = por %p95, %p96
      %p98 = scmp.ne.s32.totalorder %s87, %s90
      %p99 = scmp.eq.s32.totalorder %s21, 11
      %p100 = por %p98, %p99
      %p101 = scmp.ne.s32.totalorder %s90, %s91
      %p102 = scmp.eq.s32.totalorder %s21, 0
      %p103 = por %p101, %p102
      %p104 = scmp.ne.s32.totalorder %s90, %s91
      %p105 = scmp.eq.s32.totalorder %s22, 11
      %p106 = por %p104, %p105
      %p108 = scmp.ne.s32.totalorder %s91, %s107
      %p109 = scmp.eq.s32.totalorder %s22, 0
      %p110 = por %p108, %p109
      %s112 = sadd.s32 %s111, 1
      %p115 = scmp.eq.s32.totalorder %s16, 11
      %p116 = scmp.ne.s32.totalorder %s111, %s113
      %p117 = scmp.eq.s32.totalorder %s16, 0
      %p118 = por %p116, %p117
      %p119 = scmp.ne.s32.totalorder %s111, %s113
      %p120 = scmp.eq.s32.totalorder %s21, 11
      %p121 = por %p119, %p120
      %p122 = scmp.ne.s32.totalorder %s113, %s114
      %p123 = scmp.eq.s32.totalorder %s21, 0
      %p124 = por %p122, %p123
      %p125 = scmp.ne.s32.totalorder %s113, %s114
      %p126 = scmp.eq.s32.totalorder %s22, 11
      %p127 = por %p125, %p126
      %p129 = scmp.ne.s32.totalorder %s114, %s128
      %p130 = scmp.eq.s32.totalorder %s22, 0
      %p131 = por %p129, %p130
      %s132 = ssub.s32 %s23, %s35
      %p133 = scmp.eq.s32.totalorder %s132, 0
      %s135 = sadd.s32 %s134, 1
      %s136 = scalar_select %p133, %s134, %s135
      %p139 = pneg %p133
      %p140 = scmp.eq.s32.totalorder %s16, 11
      %p141 = por %p139, %p140
      %p142 = scmp.ne.s32.totalorder %s134, %s137
      %p143 = scmp.eq.s32.totalorder %s16, 0
      %p144 = por %p142, %p143
      %p145 = scmp.ne.s32.totalorder %s134, %s137
      %p146 = scmp.eq.s32.totalorder %s21, 11
      %p147 = por %p145, %p146
      %p148 = scmp.ne.s32.totalorder %s137, %s138
      %p149 = scmp.eq.s32.totalorder %s21, 0
      %p150 = por %p148, %p149
      %p151 = scmp.ne.s32.totalorder %s137, %s138
      %p152 = scmp.eq.s32.totalorder %s22, 11
      %p153 = por %p151, %p152
      %p155 = scmp.ne.s32.totalorder %s138, %s154
      %p156 = scmp.eq.s32.totalorder %s22, 0
      %p157 = por %p155, %p156
      %p158 = scmp.le.s32.totalorder 1, %s16
      %p159 = scmp.lt.s32.totalorder %s16, 13
      %p160 = pnand %p158, %p159
      %p161 = pneg %p160
      // Predicated region
      $region9: #{tpu_custom_call.1} parent=5 // pred_check
        _
      $region10: #{tpu_custom_call.1} parent=5 // pred_check_branch
        %163 = sbr.rel (%p160) target = $region12
      $region11: #{tpu_custom_call.1} parent=5 // pred_region
        %s164 = ssub.s32 %s16, 1
        // Predicated region
        $region13: #{tpu_custom_call.1} parent=11 // pred_check
          %p165 = pneg %p75
        $region14: #{tpu_custom_call.1} parent=11 // pred_check_branch
          %167 = sbr.rel (%p165) target = $region16
        $region15: #{tpu_custom_call.1} parent=11 // pred_region
          _
        $region16: #{tpu_custom_call.1} parent=11 // pred_fallthru
          _
        // Predicated region
        $region17: #{tpu_custom_call.1} parent=11 // pred_check
          %p168 = pneg %p124
        $region18: #{tpu_custom_call.1} parent=11 // pred_check_branch
          %170 = sbr.rel (%p168) target = $region20
        $region19: #{tpu_custom_call.1} parent=11 // pred_region
          _
        $region20: #{tpu_custom_call.1} parent=11 // pred_fallthru
          _
      $region12: #{tpu_custom_call.1} parent=5 // pred_fallthru
        _
      %p171 = scmp.lt.s32.totalorder %s16, 12
      // Predicated region
      $region21: #{tpu_custom_call.1} parent=5 // pred_check
        %p172 = pneg %p171
      $region22: #{tpu_custom_call.1} parent=5 // pred_check_branch
        %174 = sbr.rel (%p172) target = $region24
      $region23: #{tpu_custom_call.1} parent=5 // pred_region
        // Predicated region
        $region25: #{tpu_custom_call.1} parent=23 // pred_check
          %p175 = pneg %p48
        $region26: #{tpu_custom_call.1} parent=23 // pred_check_branch
          %177 = sbr.rel (%p175) target = $region28
        $region27: #{tpu_custom_call.1} parent=23 // pred_region
          %s178 = smul.u32 16, %s24
          %p179 = scmp.lt.s32.totalorder %s178, 47
          %s180 = scalar_select %p179, %s178, 47
          %s181 = smul.addr %s180, 8
          %s182 = scalar_lea.vmem %s0, %s181
          %s183 = smul.u32 16, %s24
        $region28: #{tpu_custom_call.1} parent=23 // pred_fallthru
          _
        // Predicated region
        $region29: #{tpu_custom_call.1} parent=23 // pred_check
          %p184 = pneg %p97
        $region30: #{tpu_custom_call.1} parent=23 // pred_check_branch
          %186 = sbr.rel (%p184) target = $region32
        $region31: #{tpu_custom_call.1} parent=23 // pred_region
          %s187 = sand.u32 %s87, 1
          %s188 = scalar_lea.sflag [#allocation3], %s187
          %s189 = sand.u32 %s87, 1
          %s190 = smul.addr %s189, 80
          %s191 = scalar_lea.vmem [#allocation2], %s190
          %s192 = smul.u32 10, %s23
          %s194 = ssub.s32 1280, 1280
          %195 = vsyncadd %s188, %s194
          %s196 = smul.addr %s192, 3
          %s197 = sadd.s32 %s24, %s196
          %s198 = smul.addr %s197, 128
          %s199 = scalar_lea.hbm %s2, %s198
          %s200 = sshll.u32 %s191, 4
          %s201 = int_to_ptr.vmem [resolvable:$true] %s200
          %206 = dma.hbm_to_vmem [thread:$0]  %s199, 1280, %s201, %s188, 384, 128, 8
        $region32: #{tpu_custom_call.1} parent=23 // pred_fallthru
          _
      $region24: #{tpu_custom_call.1} parent=5 // pred_fallthru
        _
      %p207 = scmp.le.s32.totalorder 1, %s16
      %p208 = scmp.lt.s32.totalorder %s16, 13
      %p209 = pnand %p207, %p208
      %p210 = pneg %p209
      // Predicated region
      $region33: #{tpu_custom_call.1} parent=5 // pred_check
        _
      $region34: #{tpu_custom_call.1} parent=5 // pred_check_branch
        %212 = sbr.rel (%p209) target = $region36
      $region35: #{tpu_custom_call.1} parent=5 // pred_region
        %s213 = ssub.s32 %s16, 1
        %s214 = sand.u32 %s90, 1
        %s215 = scalar_lea.sflag [#allocation3], %s214
        %s216 = sand.u32 %s90, 1
        %s217 = smul.addr %s216, 80
        %s218 = scalar_lea.vmem [#allocation2], %s217
        // Predicated region
        $region37: #{tpu_custom_call.1} parent=35 // pred_check
          %p219 = pneg %p103
        $region38: #{tpu_custom_call.1} parent=35 // pred_check_branch
          %221 = sbr.rel (%p219) target = $region40
        $region39: #{tpu_custom_call.1} parent=35 // pred_region
          %222 = dma.done %s215, 1280
        $region40: #{tpu_custom_call.1} parent=35 // pred_fallthru
          _
        %s223 = smul.u32 16, %s26
        %p224 = scmp.lt.s32.totalorder %s223, 47
        %s225 = scalar_select %p224, %s223, 47
        %s226 = smul.addr %s225, 8
        %s227 = scalar_lea.vmem %s0, %s226
        %p228 = pneg %p54
        %p229 = pneg %p51
        %p230 = pneg %p75
        %p231 = pneg %p72
        %s232 = sand.u32 %s90, 1
        %s233 = scalar_lea.sflag [#allocation3], %s232
        %s234 = sand.u32 %s90, 1
        %s235 = smul.addr %s234, 80
        %s236 = scalar_lea.vmem [#allocation2], %s235
        %p237 = pneg %p103
        %p238 = pneg %p100
        %p239 = pneg %p124
        %p240 = pneg %p121
        %p241 = pneg %p150
        %p242 = pneg %p147
        %s243 = sand.u32 %s137, 1
        %s244 = scalar_lea.sflag [#allocation4], %s243
        %s245 = sand.u32 %s137, 1
        %s246 = smul.addr %s245, 80
        %s247 = scalar_lea.vmem [#allocation5], %s246
        %s248 = smul.u32 16, %s26
        %p249 = scmp.lt.s32.totalorder %s248, 47
        %s250 = scalar_select %p249, %s248, 47
        %s251 = smul.addr %s250, 8
        %s252 = scalar_lea.vmem %s0, %s251
        %s253 = smul.u32 16, %s26
        %s254 = smul.u32 10, %s25
        %s255 = smul.u32 10, %s25
        %v256 = vld [vmem:[%s252] sm:$0xff]
        %v257 = vld [vmem:[%s252 + $0x8] sm:$0xff]
        %v258 = vld [vmem:[%s252 + $0x10] sm:$0xff]
        %v259 = vld [vmem:[%s252 + $0x18] sm:$0xff]
        %v260 = vld [vmem:[%s252 + $0x20] sm:$0xff]
        %v261 = vld [vmem:[%s252 + $0x28] sm:$0xff]
        %v262 = vld [vmem:[%s252 + $0x30] sm:$0xff]
        %v263 = vld [vmem:[%s252 + $0x38] sm:$0xff]
        %v264 = vld [vmem:[%s252 + $0x40] sm:$0xff]
        %v265 = vld [vmem:[%s252 + $0x48] sm:$0xff]
        %v266 = vld [vmem:[%s252 + $0x50] sm:$0xff]
        %v267 = vld [vmem:[%s252 + $0x58] sm:$0xff]
        %v268 = vld [vmem:[%s252 + $0x60] sm:$0xff]
        %v269 = vld [vmem:[%s252 + $0x68] sm:$0xff]
        %v270 = vld [vmem:[%s252 + $0x70] sm:$0xff]
        %v271 = vld [vmem:[%s252 + $0x78] sm:$0xff]
        %v272 = vld [vmem:[%s1] sm:$0xff]
        %v273 = vld [vmem:[%s1 + $0x8] sm:$0xff]
        %v274 = vld [vmem:[%s1 + $0x10] sm:$0xff]
        %v275 = vld [vmem:[%s1 + $0x18] sm:$0xff]
        %vm276 = vcmask 261120
        %v278 = vsel %vm276, %v256, 0
        %v281 = vsel %vm276, %v257, 0
        %v284 = vsel %vm276, %v258, 0
        %v287 = vsel %vm276, %v259, 0
        %v290 = vsel %vm276, %v260, 0
        %v293 = vsel %vm276, %v261, 0
        %v296 = vsel %vm276, %v262, 0
        %v299 = vsel %vm276, %v263, 0
        %v302 = vsel %vm276, %v264, 0
        %v305 = vsel %vm276, %v265, 0
        %v308 = vsel %vm276, %v266, 0
        %v311 = vsel %vm276, %v267, 0
        %v314 = vsel %vm276, %v268, 0
        %v317 = vsel %vm276, %v269, 0
        %v320 = vsel %vm276, %v270, 0
        %v323 = vsel %vm276, %v271, 0
        %325 = vmatprep.subr.mxu0 0.0
        %326 = vmatpush1.msra.mxu0 %v272
        %327 = vmatprep.subr.mxu0 0.0
        %328 = vmatpush1.msra.mxu0 %v273
        %329 = vmatprep.subr.mxu0 0.0
        %330 = vmatpush1.msra.mxu0 %v274
        %331 = vmatprep.subr.mxu0 0.0
        %332 = vmatpush1.msra.mxu0 %v275
        %333 = vmatprep.subr.mxu0 0.0
        %334 = vmatpush1.msra.mxu0 0.0
        %335 = vmatprep.subr.mxu0 0.0
        %336 = vmatpush1.msra.mxu0 0.0
        %337 = vmatprep.subr.mxu0 0.0
        %338 = vmatpush1.msra.mxu0 0.0
        %339 = vmatprep.subr.mxu0 0.0
        %340 = vmatpush1.msra.mxu0 0.0
        %341 = vmatprep.subr.mxu0 0.0
        %342 = vmatpush1.msra.mxu0 0.0
        %343 = vmatprep.subr.mxu0 0.0
        %344 = vmatpush1.msra.mxu0 0.0
        %345 = vmatprep.subr.mxu0 0.0
        %346 = vmatpush1.msra.mxu0 0.0
        %347 = vmatprep.subr.mxu0 0.0
        %348 = vmatpush1.msra.mxu0 0.0
        %349 = vmatprep.subr.mxu0 0.0
        %350 = vmatpush1.msra.mxu0 0.0
        %351 = vmatprep.subr.mxu0 0.0
        %352 = vmatpush1.msra.mxu0 0.0
        %353 = vmatprep.subr.mxu0 0.0
        %354 = vmatpush1.msra.mxu0 0.0
        %355 = vmatprep.subr.mxu0 0.0
        %356 = vmatpush1.msra.mxu0 0.0
        %357 = vmatprep.subr.mxu0 0.0
        %358 = vmatpush1.msra.mxu0 0.0
        %359 = vmatprep.subr.mxu0 0.0
        %360 = vmatpush1.msra.mxu0 0.0
        %361 = vmatprep.subr.mxu0 0.0
        %362 = vmatpush1.msra.mxu0 0.0
        %363 = vmatprep.subr.mxu0 0.0
        %364 = vmatpush1.msra.mxu0 0.0
        %365 = vmatprep.subr.mxu0 0.0
        %366 = vmatpush1.msra.mxu0 0.0
        %367 = vmatprep.subr.mxu0 0.0
        %368 = vmatpush1.msra.mxu0 0.0
        %369 = vmatprep.subr.mxu0 0.0
        %370 = vmatpush1.msra.mxu0 0.0
        %371 = vmatprep.subr.mxu0 0.0
        %372 = vmatpush1.msra.mxu0 0.0
        %373 = vmatprep.subr.mxu0 0.0
        %374 = vmatpush1.msra.mxu0 0.0
        %375 = vmatprep.subr.mxu0 0.0
        %376 = vmatpush1.msra.mxu0 0.0
        %377 = vmatprep.subr.mxu0 0.0
        %378 = vmatpush1.msra.mxu0 0.0
        %379 = vmatprep.subr.mxu0 0.0
        %380 = vmatpush1.msra.mxu0 0.0
        %381 = vmatprep.subr.mxu0 0.0
        %382 = vmatpush1.msra.mxu0 0.0
        %383 = vmatprep.subr.mxu0 0.0
        %384 = vmatpush1.msra.mxu0 0.0
        %385 = vmatprep.subr.mxu0 0.0
        %386 = vmatpush1.msra.mxu0 0.0
        %387 = vmatprep.subr.mxu0 0.0
        %388 = vmatpush1.msra.mxu0 0.0
        %389 = vmatprep.mubr.f32.mxu0 0.0
        %390 = vmatmul.mubr.f32.gmra.mrb[0].mxu0 %v278
        %v391 = vpop.f32.mrb[0].mxu0
        %v392 = vadd.f32 0.0, %v391
        %v393 = vpop.f32.mrb[0].mxu0
        %394 = vmatprep.mubr.f32.mxu0 0.0
        %395 = vmatmul.mubr.f32.gmra.mrb[0].mxu0 %v281
        %v396 = vpop.f32.mrb[0].mxu0
        %v397 = vadd.f32 0.0, %v396
        %v398 = vpop.f32.mrb[0].mxu0
        %399 = vmatprep.mubr.f32.mxu0 0.0
        %400 = vmatmul.mubr.f32.gmra.mrb[0].mxu0 %v284
        %v401 = vpop.f32.mrb[0].mxu0
        %v402 = vadd.f32 0.0, %v401
        %v403 = vpop.f32.mrb[0].mxu0
        %404 = vmatprep.mubr.f32.mxu0 0.0
        %405 = vmatmul.mubr.f32.gmra.mrb[0].mxu0 %v287
        %v406 = vpop.f32.mrb[0].mxu0
        %v407 = vadd.f32 0.0, %v406
        %v408 = vpop.f32.mrb[0].mxu0
        %409 = vmatprep.mubr.f32.mxu0 0.0
        %410 = vmatmul.mubr.f32.gmra.mrb[0].mxu0 %v290
        %v411 = vpop.f32.mrb[0].mxu0
        %v412 = vadd.f32 0.0, %v411
        %v413 = vpop.f32.mrb[0].mxu0
        %414 = vmatprep.mubr.f32.mxu0 0.0
        %415 = vmatmul.mubr.f32.gmra.mrb[0].mxu0 %v293
        %v416 = vpop.f32.mrb[0].mxu0
        %v417 = vadd.f32 0.0, %v416
        %v418 = vpop.f32.mrb[0].mxu0
        %419 = vmatprep.mubr.f32.mxu0 0.0
        %420 = vmatmul.mubr.f32.gmra.mrb[0].mxu0 %v296
        %v421 = vpop.f32.mrb[0].mxu0
        %v422 = vadd.f32 0.0, %v421
        %v423 = vpop.f32.mrb[0].mxu0
        %424 = vmatprep.mubr.f32.mxu0 0.0
        %425 = vmatmul.mubr.f32.gmra.mrb[0].mxu0 %v299
        %v426 = vpop.f32.mrb[0].mxu0
        %v427 = vadd.f32 0.0, %v426
        %v428 = vpop.f32.mrb[0].mxu0
        %429 = vmatprep.mubr.f32.mxu0 0.0
        %430 = vmatmul.mubr.f32.gmra.mrb[0].mxu0 %v302
        %v431 = vpop.f32.mrb[0].mxu0
        %v432 = vadd.f32 0.0, %v431
        %v433 = vpop.f32.mrb[0].mxu0
        %434 = vmatprep.mubr.f32.mxu0 0.0
        %435 = vmatmul.mubr.f32.gmra.mrb[0].mxu0 %v305
        %v436 = vpop.f32.mrb[0].mxu0
        %v437 = vadd.f32 0.0, %v436
        %v438 = vpop.f32.mrb[0].mxu0
        %439 = vmatprep.mubr.f32.mxu0 0.0
        %440 = vmatmul.mubr.f32.gmra.mrb[0].mxu0 %v308
        %v441 = vpop.f32.mrb[0].mxu0
        %v442 = vadd.f32 0.0, %v441
        %v443 = vpop.f32.mrb[0].mxu0
        %444 = vmatprep.mubr.f32.mxu0 0.0
        %445 = vmatmul.mubr.f32.gmra.mrb[0].mxu0 %v311
        %v446 = vpop.f32.mrb[0].mxu0
        %v447 = vadd.f32 0.0, %v446
        %v448 = vpop.f32.mrb[0].mxu0
        %449 = vmatprep.mubr.f32.mxu0 0.0
        %450 = vmatmul.mubr.f32.gmra.mrb[0].mxu0 %v314
        %v451 = vpop.f32.mrb[0].mxu0
        %v452 = vadd.f32 0.0, %v451
        %v453 = vpop.f32.mrb[0].mxu0
        %454 = vmatprep.mubr.f32.mxu0 0.0
        %455 = vmatmul.mubr.f32.gmra.mrb[0].mxu0 %v317
        %v456 = vpop.f32.mrb[0].mxu0
        %v457 = vadd.f32 0.0, %v456
        %v458 = vpop.f32.mrb[0].mxu0
        %459 = vmatprep.mubr.f32.mxu0 0.0
        %460 = vmatmul.mubr.f32.gmra.mrb[0].mxu0 %v320
        %v461 = vpop.f32.mrb[0].mxu0
        %v462 = vadd.f32 0.0, %v461
        %v463 = vpop.f32.mrb[0].mxu0
        %464 = vmatprep.mubr.f32.mxu0 0.0
        %465 = vmatmul.mubr.f32.gmra.mrb[0].mxu0 %v323
        %v466 = vpop.f32.mrb[0].mxu0
        %v467 = vadd.f32 0.0, %v466
        %v468 = vpop.f32.mrb[0].mxu0
        %469 = vdwg.mxu0
        %v470 = vld [vmem:[%s218] sm:$0xff]
        %v471 = vld [vmem:[%s218 + $0x8] sm:$0xff]
        %v472 = vld [vmem:[%s218 + $0x10] sm:$0xff]
        %v473 = vld [vmem:[%s218 + $0x18] sm:$0xff]
        %v474 = vld [vmem:[%s218 + $0x20] sm:$0xff]
        %v475 = vld [vmem:[%s218 + $0x28] sm:$0xff]
        %v476 = vld [vmem:[%s218 + $0x30] sm:$0xff]
        %v477 = vld [vmem:[%s218 + $0x38] sm:$0xff]
        %v478 = vld [vmem:[%s218 + $0x40] sm:$0xff]
        %v479 = vld [vmem:[%s218 + $0x48] sm:$0xff]
        %480 = vmatprep.subr.mxu0 0.0
        %481 = vmatpush1.msra.mxu0 %v392
        %482 = vmatprep.subr.mxu0 0.0
        %483 = vmatpush1.msra.mxu0 %v397
        %484 = vmatprep.subr.mxu0 0.0
        %485 = vmatpush1.msra.mxu0 %v402
        %486 = vmatprep.subr.mxu0 0.0
        %487 = vmatpush1.msra.mxu0 %v407
        %488 = vmatprep.subr.mxu0 0.0
        %489 = vmatpush1.msra.mxu0 %v412
        %490 = vmatprep.subr.mxu0 0.0
        %491 = vmatpush1.msra.mxu0 %v417
        %492 = vmatprep.subr.mxu0 0.0
        %493 = vmatpush1.msra.mxu0 %v422
        %494 = vmatprep.subr.mxu0 0.0
        %495 = vmatpush1.msra.mxu0 %v427
        %496 = vmatprep.subr.mxu0 0.0
        %497 = vmatpush1.msra.mxu0 %v432
        %498 = vmatprep.subr.mxu0 0.0
        %499 = vmatpush1.msra.mxu0 %v437
        %500 = vmatprep.subr.mxu0 0.0
        %501 = vmatpush1.msra.mxu0 %v442
        %502 = vmatprep.subr.mxu0 0.0
        %503 = vmatpush1.msra.mxu0 %v447
        %504 = vmatprep.subr.mxu0 0.0
        %505 = vmatpush1.msra.mxu0 %v452
        %506 = vmatprep.subr.mxu0 0.0
        %507 = vmatpush1.msra.mxu0 %v457
        %508 = vmatprep.subr.mxu0 0.0
        %509 = vmatpush1.msra.mxu0 %v462
        %510 = vmatprep.subr.mxu0 0.0
        %511 = vmatpush1.msra.mxu0 %v467
        %512 = vmatprep.subr.mxu0 0.0
        %513 = vmatpush1.msra.mxu0 0.0
        %514 = vmatprep.subr.mxu0 0.0
        %515 = vmatpush1.msra.mxu0 0.0
        %516 = vmatprep.subr.mxu0 0.0
        %517 = vmatpush1.msra.mxu0 0.0
        %518 = vmatprep.subr.mxu0 0.0
        %519 = vmatpush1.msra.mxu0 0.0
        %520 = vmatprep.subr.mxu0 0.0
        %521 = vmatpush1.msra.mxu0 0.0
        %522 = vmatprep.subr.mxu0 0.0
        %523 = vmatpush1.msra.mxu0 0.0
        %524 = vmatprep.subr.mxu0 0.0
        %525 = vmatpush1.msra.mxu0 0.0
        %526 = vmatprep.subr.mxu0 0.0
        %527 = vmatpush1.msra.mxu0 0.0
        %528 = vmatprep.subr.mxu0 0.0
        %529 = vmatpush1.msra.mxu0 0.0
        %530 = vmatprep.subr.mxu0 0.0
        %531 = vmatpush1.msra.mxu0 0.0
        %532 = vmatprep.subr.mxu0 0.0
        %533 = vmatpush1.msra.mxu0 0.0
        %534 = vmatprep.subr.mxu0 0.0
        %535 = vmatpush1.msra.mxu0 0.0
        %536 = vmatprep.subr.mxu0 0.0
        %537 = vmatpush1.msra.mxu0 0.0
        %538 = vmatprep.subr.mxu0 0.0
        %539 = vmatpush1.msra.mxu0 0.0
        %540 = vmatprep.subr.mxu0 0.0
        %541 = vmatpush1.msra.mxu0 0.0
        %542 = vmatprep.subr.mxu0 0.0
        %543 = vmatpush1.msra.mxu0 0.0
        %544 = vmatprep.mubr.f32.mxu0 0.0
        %545 = vmatmul.mubr.f32.gmra.mrb[0].mxu0 %v470
        %v546 = vpop.f32.mrb[0].mxu0
        %v547 = vadd.f32 0.0, %v546
        %v548 = vpop.f32.mrb[0].mxu0
        %549 = vmatprep.mubr.f32.mxu0 0.0
        %550 = vmatmul.mubr.f32.gmra.mrb[0].mxu0 %v471
        %v551 = vpop.f32.mrb[0].mxu0
        %v552 = vadd.f32 0.0, %v551
        %v553 = vpop.f32.mrb[0].mxu0
        %554 = vmatprep.mubr.f32.mxu0 0.0
        %555 = vmatmul.mubr.f32.gmra.mrb[0].mxu0 %v472
        %v556 = vpop.f32.mrb[0].mxu0
        %v557 = vadd.f32 0.0, %v556
        %v558 = vpop.f32.mrb[0].mxu0
        %559 = vmatprep.mubr.f32.mxu0 0.0
        %560 = vmatmul.mubr.f32.gmra.mrb[0].mxu0 %v473
        %v561 = vpop.f32.mrb[0].mxu0
        %v562 = vadd.f32 0.0, %v561
        %v563 = vpop.f32.mrb[0].mxu0
        %564 = vmatprep.mubr.f32.mxu0 0.0
        %565 = vmatmul.mubr.f32.gmra.mrb[0].mxu0 %v474
        %v566 = vpop.f32.mrb[0].mxu0
        %v567 = vadd.f32 0.0, %v566
        %v568 = vpop.f32.mrb[0].mxu0
        %569 = vmatprep.mubr.f32.mxu0 0.0
        %570 = vmatmul.mubr.f32.gmra.mrb[0].mxu0 %v475
        %v571 = vpop.f32.mrb[0].mxu0
        %v572 = vadd.f32 0.0, %v571
        %v573 = vpop.f32.mrb[0].mxu0
        %574 = vmatprep.mubr.f32.mxu0 0.0
        %575 = vmatmul.mubr.f32.gmra.mrb[0].mxu0 %v476
        %v576 = vpop.f32.mrb[0].mxu0
        %v577 = vadd.f32 0.0, %v576
        %v578 = vpop.f32.mrb[0].mxu0
        %579 = vmatprep.mubr.f32.mxu0 0.0
        %580 = vmatmul.mubr.f32.gmra.mrb[0].mxu0 %v477
        %v581 = vpop.f32.mrb[0].mxu0
        %v582 = vadd.f32 0.0, %v581
        %v583 = vpop.f32.mrb[0].mxu0
        %584 = vmatprep.mubr.f32.mxu0 0.0
        %585 = vmatmul.mubr.f32.gmra.mrb[0].mxu0 %v478
        %v586 = vpop.f32.mrb[0].mxu0
        %v587 = vadd.f32 0.0, %v586
        %v588 = vpop.f32.mrb[0].mxu0
        %589 = vmatprep.mubr.f32.mxu0 0.0
        %590 = vmatmul.mubr.f32.gmra.mrb[0].mxu0 %v479
        %v591 = vpop.f32.mrb[0].mxu0
        %v592 = vadd.f32 0.0, %v591
        %v593 = vpop.f32.mrb[0].mxu0
        %594 = vdwg.mxu0
        %p595 = scmp.eq.s32.totalorder %s26, 0
        // Predicated region
        $region41: #{tpu_custom_call.1} parent=35 // pred_check
          %p596 = pneg %p595
        $region42: #{tpu_custom_call.1} parent=35 // pred_check_branch
          %598 = sbr.rel (%p596) target = $region44
        $region43: #{tpu_custom_call.1} parent=35 // pred_region
          %v599 = vld [vmem:[%s3] sm:$0x1]
          %v601 = vlaneseq
          %v602 = vshrl.u32 %v601, 7
          %v603 = vsub.s32 0, %v602
          %v604 = vrot.slane %v599, %v603
          %v606 = vadd.f32 %v547, %v604
          %v607 = vadd.f32 %v552, %v604
          %v608 = vadd.f32 %v557, %v604
          %v609 = vadd.f32 %v562, %v604
          %v610 = vadd.f32 %v567, %v604
          %v611 = vadd.f32 %v572, %v604
          %v612 = vadd.f32 %v577, %v604
          %v613 = vadd.f32 %v582, %v604
          %v614 = vadd.f32 %v587, %v604
          %v615 = vadd.f32 %v592, %v604
          %616 = vst [vmem:[%s247] sm:$0xff] %v606
          %617 = vst [vmem:[%s247 + $0x8] sm:$0xff] %v607
          %618 = vst [vmem:[%s247 + $0x10] sm:$0xff] %v608
          %619 = vst [vmem:[%s247 + $0x18] sm:$0xff] %v609
          %620 = vst [vmem:[%s247 + $0x20] sm:$0xff] %v610
          %621 = vst [vmem:[%s247 + $0x28] sm:$0xff] %v611
          %622 = vst [vmem:[%s247 + $0x30] sm:$0xff] %v612
          %623 = vst [vmem:[%s247 + $0x38] sm:$0xff] %v613
          %624 = vst [vmem:[%s247 + $0x40] sm:$0xff] %v614
          %625 = vst [vmem:[%s247 + $0x48] sm:$0xff] %v615
        $region44: #{tpu_custom_call.1} parent=35 // pred_fallthru
          _
        %p626 = scmp.ne.s32.totalorder %s26, 0
        // Predicated region
        $region45: #{tpu_custom_call.1} parent=35 // pred_check
          %p627 = pneg %p626
        $region46: #{tpu_custom_call.1} parent=35 // pred_check_branch
          %629 = sbr.rel (%p627) target = $region48
        $region47: #{tpu_custom_call.1} parent=35 // pred_region
          %v630 = vld [vmem:[%s247] sm:$0xff]
          %v631 = vld [vmem:[%s247 + $0x8] sm:$0xff]
          %v632 = vld [vmem:[%s247 + $0x10] sm:$0xff]
          %v633 = vld [vmem:[%s247 + $0x18] sm:$0xff]
          %v634 = vld [vmem:[%s247 + $0x20] sm:$0xff]
          %v635 = vld [vmem:[%s247 + $0x28] sm:$0xff]
          %v636 = vld [vmem:[%s247 + $0x30] sm:$0xff]
          %v637 = vld [vmem:[%s247 + $0x38] sm:$0xff]
          %v638 = vld [vmem:[%s247 + $0x40] sm:$0xff]
          %v639 = vld [vmem:[%s247 + $0x48] sm:$0xff]
          %v640 = vadd.f32 %v630, %v547
          %v641 = vadd.f32 %v631, %v552
          %v642 = vadd.f32 %v632, %v557
          %v643 = vadd.f32 %v633, %v562
          %v644 = vadd.f32 %v634, %v567
          %v645 = vadd.f32 %v635, %v572
          %v646 = vadd.f32 %v636, %v577
          %v647 = vadd.f32 %v637, %v582
          %v648 = vadd.f32 %v638, %v587
          %v649 = vadd.f32 %v639, %v592
          %650 = vst [vmem:[%s247] sm:$0xff] %v640
          %651 = vst [vmem:[%s247 + $0x8] sm:$0xff] %v641
          %652 = vst [vmem:[%s247 + $0x10] sm:$0xff] %v642
          %653 = vst [vmem:[%s247 + $0x18] sm:$0xff] %v643
          %654 = vst [vmem:[%s247 + $0x20] sm:$0xff] %v644
          %655 = vst [vmem:[%s247 + $0x28] sm:$0xff] %v645
          %656 = vst [vmem:[%s247 + $0x30] sm:$0xff] %v646
          %657 = vst [vmem:[%s247 + $0x38] sm:$0xff] %v647
          %658 = vst [vmem:[%s247 + $0x40] sm:$0xff] %v648
          %659 = vst [vmem:[%s247 + $0x48] sm:$0xff] %v649
        $region48: #{tpu_custom_call.1} parent=35 // pred_fallthru
          _
        %s660 = sand.u32 %s137, 1
        %s661 = scalar_lea.sflag [#allocation4], %s660
        %s662 = sand.u32 %s137, 1
        %s663 = smul.addr %s662, 80
        %s664 = scalar_lea.vmem [#allocation5], %s663
        // Predicated region
        $region49: #{tpu_custom_call.1} parent=35 // pred_check
          %p665 = pneg %p147
        $region50: #{tpu_custom_call.1} parent=35 // pred_check_branch
          %667 = sbr.rel (%p665) target = $region52
        $region51: #{tpu_custom_call.1} parent=35 // pred_region
          %s668 = smul.u32 10, %s25
          %s670 = ssub.s32 1280, 1280
          %671 = vsyncadd %s661, %s670
          %s672 = smul.addr %s668, 128
          %s673 = scalar_lea.hbm %s4, %s672
          %s674 = sshll.u32 %s664, 4
          %s675 = int_to_ptr.vmem [resolvable:$true] %s674
          %680 = dma.vmem_to_hbm [thread:$0]  %s675, 1280, %s673, %s661, 128, 128, 8
        $region52: #{tpu_custom_call.1} parent=35 // pred_fallthru
          _
      $region36: #{tpu_custom_call.1} parent=5 // pred_fallthru
        _
      %p681 = scmp.le.s32.totalorder 2, %s16
      // Predicated region
      $region53: #{tpu_custom_call.1} parent=5 // pred_check
        %p682 = pneg %p681
      $region54: #{tpu_custom_call.1} parent=5 // pred_check_branch
        %684 = sbr.rel (%p682) target = $region56
      $region55: #{tpu_custom_call.1} parent=5 // pred_region
        %s685 = ssub.s32 %s16, 2
        // Predicated region
        $region57: #{tpu_custom_call.1} parent=55 // pred_check
          %p686 = pneg %p153
        $region58: #{tpu_custom_call.1} parent=55 // pred_check_branch
          %688 = sbr.rel (%p686) target = $region60
        $region59: #{tpu_custom_call.1} parent=55 // pred_region
          %s689 = sand.u32 %s138, 1
          %s690 = scalar_lea.sflag [#allocation4], %s689
          %s691 = sand.u32 %s138, 1
          %s692 = smul.addr %s691, 80
          %s693 = scalar_lea.vmem [#allocation5], %s692
          %694 = dma.done %s690, 1280
        $region60: #{tpu_custom_call.1} parent=55 // pred_fallthru
          _
      $region56: #{tpu_custom_call.1} parent=5 // pred_fallthru
        _
    $region6: #{tpu_custom_call.1} parent=1 // loop_footer
      %s20 = sadd.s32 1, %s16
    $region7: #{tpu_custom_call.1} parent=1 // loop_footer_branch
      %15 = sbr.rel target = $region3
    $region8: #{tpu_custom_call.1} parent=1 // loop_exit
      _
    %695 = vsyncpa [#allocation3], 1
    %s696 = scalar_lea.sflag [#allocation3], 1
    %697 = vsyncpa %s696, 1
    %698 = vsyncpa [#allocation4], 1
    %s699 = scalar_lea.sflag [#allocation4], 1
    %700 = vsyncpa %s699, 1

</llo_original>
